<compile_context>
chip_gen: v5e
topology: v5e:2x2
jax: 0.10.0
libtpu: 0.0.40
codegen_flags: <defaults>
</compile_context>

<pallas_src>
import functools
from typing import NamedTuple

import jax
import jax.numpy as jnp
from jax.experimental import pallas as pl
from jax.experimental.pallas import tpu as pltpu

_MAX_RESIDENT_CLASSES = 8192      # above this, block the class axis (online logsumexp)
_CLASS_TILE = 2048                # class-tile width (multiple of 128)
_MAX_ROW_TILE = 4096              # sanity cap on the row tile
_FUSED_PATH_MAX_BYTES = 1 << 20   # inputs smaller than this go through the fused fast path


class _ChipConfig(NamedTuple):
    tile_bytes: int   # per input stream, per pipeline buffer
    vmem_limit: int   # scoped VMEM limit handed to Mosaic
    multi_core: bool  # chip has >1 TensorCore (megacore / v7x style)


@functools.lru_cache(maxsize=None)
def _chip_config() -> _ChipConfig:
    """Generation-aware sizing. Conservative fallbacks if introspection fails."""
    kind = ""
    try:
        kind = (jax.devices()[0].device_kind or "").lower()
    except Exception:
        pass
    vmem_cap = None
    try:
        vmem_cap = int(getattr(pltpu.get_tpu_info(), "vmem_capacity_bytes", 0)) or None
    except Exception:
        vmem_cap = None
    small_vmem = (vmem_cap is not None and vmem_cap <= (64 << 20)) or ("v7" in kind)
    multi_core = small_vmem or ("v4" in kind) or ("v5p" in kind)
    if small_vmem:
        # v7x-class: 64 MiB physical VMEM per TensorCore -> stay conservative.
        return _ChipConfig(tile_bytes=4 << 20, vmem_limit=48 << 20, multi_core=multi_core)
    # 128 MiB VMEM parts (v5e / v6e): larger resident tiles, fewer grid steps.
    return _ChipConfig(tile_bytes=10 << 20, vmem_limit=64 << 20, multi_core=multi_core)


def _pick_row_tile(num_rows, row_width_elems, cfg):
    """Largest multiple-of-8 row tile whose f32 block fits the per-stream byte budget.
    On multi-core chips the tile is additionally capped so grid_r >= 2 (megacore split)."""
    if num_rows <= 8:
        return num_rows                       # full-dim block is always layout-legal
    cap = max(8, cfg.tile_bytes // (row_width_elems * 4))
    tile = min(num_rows, cap, _MAX_ROW_TILE)
    tile = max(8, (tile // 8) * 8)
    if cfg.multi_core:
        half = (((num_rows + 1) // 2) + 7) // 8 * 8   # round8(ceil(num_rows/2)) < num_rows
        tile = min(tile, half)
    return tile


# --------------------------- MSE head: sum of squared error ---------------------------

def _mse_kernel(pred_ref, tgt_ref, out_ref, *, num_rows, tile_r, use_partials):
    i = pl.program_id(0)
    diff = (pred_ref[...] - tgt_ref[...]).astype(jnp.float32)          # (tile_r, D)
    sq = diff * diff
    if num_rows % tile_r != 0:                                         # trace-time check
        row_ids = i * tile_r + jax.lax.broadcasted_iota(jnp.int32, sq.shape, 0)
        sq = jnp.where(row_ids < num_rows, sq, 0.0)                    # mask padded rows
    partial = jnp.sum(sq)
    if use_partials:
        # One lane-dense (8,128) block per row tile; reduced in the wrapper ('parallel' axis).
        out_ref[0] = jnp.full((8, 128), partial, jnp.float32)
    else:
        # Single resident accumulator block (row axis is 'arbitrary' on single-TC chips).
        @pl.when(i == 0)
        def _init():
            out_ref[...] = jnp.zeros_like(out_ref)
        out_ref[...] += partial


def _mse_sum(pred, tgt, cfg):
    num_rows, width = pred.shape
    tile_r = _pick_row_tile(num_rows, width, cfg)
    grid_r = pl.cdiv(num_rows, tile_r)
    use_partials = cfg.multi_core and grid_r > 1
    kernel = functools.partial(_mse_kernel, num_rows=num_rows, tile_r=tile_r,
                               use_partials=use_partials)
    if use_partials:
        out_shape = jax.ShapeDtypeStruct((grid_r, 8, 128), jnp.float32)
        out_spec = pl.BlockSpec((1, 8, 128), lambda i: (i, 0, 0))
        dims = ("parallel",)
    else:
        out_shape = jax.ShapeDtypeStruct((8, 128), jnp.float32)
        out_spec = pl.BlockSpec((8, 128), lambda i: (0, 0))
        dims = ("arbitrary",)
    out = pl.pallas_call(
        kernel,
        out_shape=out_shape,
        grid_spec=pltpu.PrefetchScalarGridSpec(
            num_scalar_prefetch=0,
            grid=(grid_r,),
            in_specs=[
                pl.BlockSpec((tile_r, width), lambda i: (i, 0)),
                pl.BlockSpec((tile_r, width), lambda i: (i, 0)),
            ],
            out_specs=out_spec,
        ),
        compiler_params=pltpu.CompilerParams(
            dimension_semantics=dims,
            vmem_limit_bytes=cfg.vmem_limit,
        ),
    )(pred, tgt)
    if use_partials:
        return jnp.sum(out[:, 0, 0])
    return out[0, 0]


# ----------------- CE head: sum over rows of (logsumexp - picked logit) ----------------

def _ce_kernel(logits_ref, labels_ref, out_ref, m_sc, l_sc, p_sc, *,
               num_rows, num_cols, tile_r, tile_c, use_partials):
    i = pl.program_id(0)          # row-tile index
    c = pl.program_id(1)          # class-tile index (reduction axis, last)
    last_c = pl.num_programs(1) - 1

    @pl.when(c == 0)
    def _init_row():
        m_sc[...] = jnp.full((tile_r, 1), -jnp.inf, jnp.float32)
        l_sc[...] = jnp.zeros((tile_r, 1), jnp.float32)
        p_sc[...] = jnp.zeros((tile_r, 1), jnp.float32)

    if not use_partials:
        @pl.when((i == 0) & (c == 0))
        def _init_out():
            out_ref[...] = jnp.zeros_like(out_ref)

    logits = logits_ref[...].astype(jnp.float32)                       # (tile_r, tile_c)
    labels = labels_ref[...]                                           # (tile_r, 1) int32
    col_ids = c * tile_c + jax.lax.broadcasted_iota(jnp.int32, logits.shape, 1)

    def lse_update(x):
        # Online (flash-style) logsumexp accumulation over class tiles.
        m_prev = m_sc[...]
        m_new = jnp.maximum(m_prev, jnp.max(x, axis=-1, keepdims=True))
        alpha = jnp.exp(m_prev - m_new)
        l_sc[...] = alpha * l_sc[...] + jnp.sum(jnp.exp(x - m_new), axis=-1, keepdims=True)
        m_sc[...] = m_new

    if num_cols % tile_c != 0:
        # Only the last class tile contains padded columns; mask there only.
        @pl.when(c == last_c)
        def _masked():
            lse_update(jnp.where(col_ids < num_cols, logits, -jnp.inf))

        @pl.when(c != last_c)
        def _unmasked():
            lse_update(logits)
    else:
        lse_update(logits)

    # Picked-logit gather: labels are in [0, num_cols), so they never hit padded columns.
    p_sc[...] += jnp.sum(jnp.where(col_ids == labels, logits, 0.0), axis=-1, keepdims=True)

    @pl.when(c == last_c)
    def _finalize():
        lse = m_sc[...] + jnp.log(l_sc[...])                           # (tile_r, 1)
        per_row = lse - p_sc[...]
        if num_rows % tile_r != 0:                                     # trace-time check
            row_ids = i * tile_r + jax.lax.broadcasted_iota(jnp.int32, (tile_r, 1), 0)
            per_row = jnp.where(row_ids < num_rows, per_row, 0.0)      # mask padded rows
        partial = jnp.sum(per_row)
        if use_partials:
            out_ref[0] = jnp.full((8, 128), partial, jnp.float32)
        else:
            out_ref[...] += partial


def _ce_sum(logits, labels2d, cfg):
    num_rows, num_cols = logits.shape
    tile_c = num_cols if num_cols <= _MAX_RESIDENT_CLASSES else _CLASS_TILE
    tile_r = _pick_row_tile(num_rows, tile_c, cfg)
    grid_r = pl.cdiv(num_rows, tile_r)
    grid_c = pl.cdiv(num_cols, tile_c)
    use_partials = cfg.multi_core and grid_r > 1
    kernel = functools.partial(_ce_kernel, num_rows=num_rows, num_cols=num_cols,
                               tile_r=tile_r, tile_c=tile_c, use_partials=use_partials)
    if use_partials:
        out_shape = jax.ShapeDtypeStruct((grid_r, 8, 128), jnp.float32)
        out_spec = pl.BlockSpec((1, 8, 128), lambda i, c: (i, 0, 0))
        dims = ("parallel", "arbitrary")
    else:
        out_shape = jax.ShapeDtypeStruct((8, 128), jnp.float32)
        out_spec = pl.BlockSpec((8, 128), lambda i, c: (0, 0))
        dims = ("arbitrary", "arbitrary")
    out = pl.pallas_call(
        kernel,
        out_shape=out_shape,
        grid_spec=pltpu.PrefetchScalarGridSpec(
            num_scalar_prefetch=0,
            grid=(grid_r, grid_c),
            in_specs=[
                pl.BlockSpec((tile_r, tile_c), lambda i, c: (i, c)),
                pl.BlockSpec((tile_r, 1), lambda i, c: (i, 0)),
            ],
            out_specs=out_spec,
            scratch_shapes=[
                pltpu.VMEM((tile_r, 1), jnp.float32),   # running max   m_i
                pltpu.VMEM((tile_r, 1), jnp.float32),   # running sum   l_i
                pltpu.VMEM((tile_r, 1), jnp.float32),   # picked-logit accumulator
            ],
        ),
        compiler_params=pltpu.CompilerParams(
            dimension_semantics=dims,
            vmem_limit_bytes=cfg.vmem_limit,
        ),
    )(logits, labels2d)
    if use_partials:
        return jnp.sum(out[:, 0, 0])
    return out[0, 0]


# --------------------- fused fast path for the module's tiny shapes --------------------

def _fused_small_kernel(reg_out_ref, reg_tgt_ref, logits_ref, labels_ref, out_ref, *,
                        inv_reg, inv_cls):
    diff = (reg_out_ref[...] - reg_tgt_ref[...]).astype(jnp.float32)
    mse_sum = jnp.sum(diff * diff)
    x = logits_ref[...].astype(jnp.float32)                            # (N, C)
    m = jnp.max(x, axis=-1, keepdims=True)
    lse = m + jnp.log(jnp.sum(jnp.exp(x - m), axis=-1, keepdims=True)) # (N, 1)
    col_ids = jax.lax.broadcasted_iota(jnp.int32, x.shape, 1)
    picked = jnp.sum(jnp.where(col_ids == labels_ref[...], x, 0.0), axis=-1, keepdims=True)
    ce_sum = jnp.sum(lse - picked)
    out_ref[0, 0] = mse_sum * inv_reg + ce_sum * inv_cls               # w_reg = w_cls = 1


def _fused_small(reg_out, reg_tgt, logits, labels2d):
    n_reg_elems = reg_out.shape[0] * reg_out.shape[1]
    n_cls_rows = logits.shape[0]
    kernel = functools.partial(_fused_small_kernel,
                               inv_reg=1.0 / n_reg_elems, inv_cls=1.0 / n_cls_rows)
    out = pl.pallas_call(
        kernel,
        out_shape=jax.ShapeDtypeStruct((1, 1), jnp.float32),
        in_specs=[pl.BlockSpec(memory_space=pltpu.MemorySpace.VMEM)] * 4,
        out_specs=pl.BlockSpec(memory_space=pltpu.MemorySpace.SMEM),
    )(reg_out, reg_tgt, logits, labels2d)
    return out[0, 0]


# -------------------------------------- wrapper ---------------------------------------

def weighted_multi_output_loss(reg_out, reg_tgt, logits, labels):
    """reg_out/reg_tgt: (B, D) float; logits: (N, C) float; labels: (N,) int."""
    labels2d = labels.astype(jnp.int32).reshape(-1, 1)                 # (N, 1)
    total_bytes = ((reg_out.size + reg_tgt.size) * reg_out.dtype.itemsize
                   + logits.size * logits.dtype.itemsize)
    if total_bytes <= _FUSED_PATH_MAX_BYTES:
        # Tiny nominal shapes: one launch, both heads, scalar SMEM output.
        return _fused_small(reg_out, reg_tgt, logits, labels2d)
    cfg = _chip_config()
    n_reg_elems = reg_out.shape[0] * reg_out.shape[1]                  # GLOBAL divisors
    n_cls_rows = logits.shape[0]
    mse = _mse_sum(reg_out, reg_tgt, cfg) / n_reg_elems
    ce = _ce_sum(logits, labels2d, cfg) / n_cls_rows
    return 1.0 * mse + 1.0 * ce                                        # w_reg = w_cls = 1


def _reference(reg_out, reg_tgt, logits, labels):
    mse = jnp.mean((reg_out - reg_tgt) ** 2)
    lse = jax.nn.logsumexp(logits, axis=-1)
    picked = jnp.take_along_axis(logits, labels[:, None], axis=-1)[:, 0]
    ce = jnp.mean(lse - picked)
    return mse + ce


if __name__ == "__main__":
    keys = jax.random.split(jax.random.PRNGKey(0), 12)

    # ---- Test 1: small nominal shapes (module's two heads) -> fused single-call path ----
    B, D = 8, 32          # regression head: output[0] / target[0]
    N, C = 8, 16          # classification head: output[1] logits / target[1] labels
    reg_out = jax.random.normal(keys[0], (B, D), dtype=jnp.float32)
    reg_tgt = jax.random.normal(keys[1], (B, D), dtype=jnp.float32)
    logits = jax.random.normal(keys[2], (N, C), dtype=jnp.float32)
    labels = jax.random.randint(keys[3], (N,), 0, C, dtype=jnp.int32)

    loss = jax.block_until_ready(
        weighted_multi_output_loss(reg_out, reg_tgt, logits, labels))
    ref = _reference(reg_out, reg_tgt, logits, labels)
    assert jnp.allclose(loss, ref, rtol=1e-5, atol=1e-5), (loss, ref)

    # ---- Test 2: large divisible shapes -> tiled streaming + class-blocked online LSE ----
    B2, D2 = 4096, 256
    N2, C2 = 512, 16384
    reg_out2 = jax.random.normal(keys[4], (B2, D2), dtype=jnp.float32)
    reg_tgt2 = jax.random.normal(keys[5], (B2, D2), dtype=jnp.float32)
    logits2 = jax.random.normal(keys[6], (N2, C2), dtype=jnp.float32)
    labels2 = jax.random.randint(keys[7], (N2,), 0, C2, dtype=jnp.int32)

    loss2 = jax.block_until_ready(
        weighted_multi_output_loss(reg_out2, reg_tgt2, logits2, labels2))
    ref2 = _reference(reg_out2, reg_tgt2, logits2, labels2)
    assert jnp.allclose(loss2, ref2, rtol=1e-4, atol=1e-4), (loss2, ref2)

    # ---- Test 3: non-divisible shapes -> padded-row and padded-class masking paths ----
    B3, D3 = 137, 200
    N3, C3 = 129, 9000
    reg_out3 = jax.random.normal(keys[8], (B3, D3), dtype=jnp.float32)
    reg_tgt3 = jax.random.normal(keys[9], (B3, D3), dtype=jnp.float32)
    logits3 = jax.random.normal(keys[10], (N3, C3), dtype=jnp.float32)
    labels3 = jax.random.randint(keys[11], (N3,), 0, C3, dtype=jnp.int32)

    loss3 = jax.block_until_ready(
        weighted_multi_output_loss(reg_out3, reg_tgt3, logits3, labels3))
    ref3 = _reference(reg_out3, reg_tgt3, logits3, labels3)
    assert jnp.allclose(loss3, ref3, rtol=1e-4, atol=1e-4), (loss3, ref3)

    # TODO(synk): labels are assumed in [0, C); no ignore_index / out-of-range error like PyTorch.
    print("KERNEL_OK")
</pallas_src>

<mosaic_0001>
module attributes {stable_mosaic.version = 11 : i64} {
  func.func @_fused_small_kernel(%arg0: memref<8x32xf32, #tpu.memory_space<vmem>>, %arg1: memref<8x32xf32, #tpu.memory_space<vmem>>, %arg2: memref<8x16xf32, #tpu.memory_space<vmem>>, %arg3: memref<8x1xi32, #tpu.memory_space<vmem>>, %arg4: memref<1x1xf32, #tpu.memory_space<smem>>) attributes {dimension_semantics = [], scalar_prefetch = 0 : i64, scratch_operands = 0 : i64, tpu.core_type = #tpu.core_type<tc>} {
    %c0 = arith.constant 0 : index
    %c0_0 = arith.constant 0 : index
    %0 = vector.load %arg0[%c0, %c0_0] : memref<8x32xf32, #tpu.memory_space<vmem>>, vector<8x32xf32>
    %c0_1 = arith.constant 0 : index
    %c0_2 = arith.constant 0 : index
    %1 = vector.load %arg1[%c0_1, %c0_2] : memref<8x32xf32, #tpu.memory_space<vmem>>, vector<8x32xf32>
    %2 = arith.subf %0, %1 : vector<8x32xf32>
    %3 = arith.mulf %2, %2 : vector<8x32xf32>
    %4 = vector.shape_cast %3 : vector<8x32xf32> to vector<1x8x32xf32>
    %cst = arith.constant dense<0.000000e+00> : vector<1xf32>
    %5 = vector.multi_reduction <add>, %4, %cst [1, 2] : vector<1x8x32xf32> to vector<1xf32>
    %6 = vector.shape_cast %5 : vector<1xf32> to vector<1x1x1xf32>
    %7 = vector.extract %6[0, 0, 0] : f32 from vector<1x1x1xf32>
    %c0_3 = arith.constant 0 : index
    %c0_4 = arith.constant 0 : index
    %8 = vector.load %arg2[%c0_3, %c0_4] : memref<8x16xf32, #tpu.memory_space<vmem>>, vector<8x16xf32>
    %cst_5 = arith.constant dense<0xFF800000> : vector<8xf32>
    %9 = vector.multi_reduction <maximumf>, %8, %cst_5 [1] : vector<8x16xf32> to vector<8xf32>
    %10 = vector.shape_cast %9 : vector<8xf32> to vector<8x1xf32>
    %11 = vector.broadcast %10 : vector<8x1xf32> to vector<8x16xf32>
    %12 = arith.subf %8, %11 : vector<8x16xf32>
    %13 = math.exp %12 : vector<8x16xf32>
    %cst_6 = arith.constant dense<0.000000e+00> : vector<8xf32>
    %14 = vector.multi_reduction <add>, %13, %cst_6 [1] : vector<8x16xf32> to vector<8xf32>
    %15 = vector.shape_cast %14 : vector<8xf32> to vector<8x1xf32>
    %16 = math.log %15 : vector<8x1xf32>
    %17 = arith.addf %10, %16 : vector<8x1xf32>
    %18 = tpu.iota {dimensions = array<i32: 1>} : vector<8x16xi32>
    %c0_7 = arith.constant 0 : index
    %c0_8 = arith.constant 0 : index
    %19 = vector.load %arg3[%c0_7, %c0_8] : memref<8x1xi32, #tpu.memory_space<vmem>>, vector<8x1xi32>
    %20 = vector.broadcast %19 : vector<8x1xi32> to vector<8x16xi32>
    %21 = arith.cmpi eq, %18, %20 : vector<8x16xi32>
    %cst_9 = arith.constant 0.000000e+00 : f32
    %22 = vector.broadcast %cst_9 : f32 to vector<8x16xf32>
    %23 = arith.select %21, %8, %22 : vector<8x16xi1>, vector<8x16xf32>
    %cst_10 = arith.constant dense<0.000000e+00> : vector<8xf32>
    %24 = vector.multi_reduction <add>, %23, %cst_10 [1] : vector<8x16xf32> to vector<8xf32>
    %25 = vector.shape_cast %24 : vector<8xf32> to vector<8x1xf32>
    %26 = arith.subf %17, %25 : vector<8x1xf32>
    %27 = vector.shape_cast %26 : vector<8x1xf32> to vector<1x8x1xf32>
    %cst_11 = arith.constant dense<0.000000e+00> : vector<1xf32>
    %28 = vector.multi_reduction <add>, %27, %cst_11 [1, 2] : vector<1x8x1xf32> to vector<1xf32>
    %29 = vector.shape_cast %28 : vector<1xf32> to vector<1x1x1xf32>
    %30 = vector.extract %29[0, 0, 0] : f32 from vector<1x1x1xf32>
    %cst_12 = arith.constant 3.906250e-03 : f32
    %31 = arith.mulf %7, %cst_12 : f32
    %cst_13 = arith.constant 1.250000e-01 : f32
    %32 = arith.mulf %30, %cst_13 : f32
    %33 = arith.addf %31, %32 : f32
    %c0_14 = arith.constant 0 : index
    %c0_15 = arith.constant 0 : index
    %34 = memref.load %arg4[%c0_14, %c0_15] : memref<1x1xf32, #tpu.memory_space<smem>>
    memref.store %33, %arg4[%c0_14, %c0_15] : memref<1x1xf32, #tpu.memory_space<smem>>
    return
  }
}

</mosaic_0001>

<llo_original>
// kernel: tpu_custom_call.1
$region0: #{tpu_custom_call.1}
  #allocation0 [shape = 'u32[]', space=smem, size = 0x4, offset = 0x4, fixed_abs, tag = 'smem constant byte address 0x4 - core index']
  #allocation1 [shape = 'u32[72,128]{1,0:T(1,128)}', space=vmem, size = 0x9000, scoped, tag = 'internal scratch']
  %s0 = inlined_call_operand.vmem [shape: f32[8,32], index: 0, kind: input, shape index: {}]
  %s1 = inlined_call_operand.hbm [shape: f32[8,32], index: 1, kind: input, shape index: {}]
  %s2 = inlined_call_operand.hbm [shape: f32[8,16], index: 2, kind: input, shape index: {}]
  %s3 = inlined_call_operand.vmem [shape: s32[8,1], index: 3, kind: input, shape index: {}]
  %s4 = inlined_call_operand.hbm [shape: f32[1,1], index: 4, kind: output, shape index: {}]
  %s5 = sld [smem:[#allocation0]]
  $region34: #{tpu_custom_call.1} parent=0
    _
  %s7 = ssub.s32 1, %s5
  %s8 = scalar_select 0, %s7, %s5
  $region1: #{tpu_custom_call.1} parent=0
    #allocation2 [shape = 'u8[4096]{0}', space=vmem, size = 0x1000, scoped, tag = 'input window, operand 1, single buffered']
    #allocation3 [shape = 's32[1]{0}', space=sflag, size = 0x4, scoped, tag = 'scoped memory for tpu_custom_call.1']
    #allocation4 [shape = 's32[1]{0}', space=sflag, size = 0x4, scoped, tag = 'scoped memory for tpu_custom_call.1']
    #allocation5 [shape = 'u8[4096]{0}', space=vmem, size = 0x1000, scoped, tag = 'input window, operand 2, single buffered']
    #allocation6 [shape = 's32[1]{0}', space=sflag, size = 0x4, scoped, tag = 'scoped memory for tpu_custom_call.1']
    #allocation7 [shape = 'u8[512]{0}', space=smem, size = 0x200, scoped, tag = 'output window, operand 0, single buffered']
    %9 = vsyncpa [#allocation3], 0
    %10 = vsyncpa [#allocation6], 0
    %11 = vsyncpa [#allocation4], 0
    // Predicated region
    $region2: #{tpu_custom_call.1} parent=1 // pred_check
      _
    $region3: #{tpu_custom_call.1} parent=1 // pred_check_branch
      %13 = sbr.rel (0) target = $region5
    $region4: #{tpu_custom_call.1} parent=1 // pred_region
      _
    $region5: #{tpu_custom_call.1} parent=1 // pred_fallthru
      _
    // Predicated region
    $region6: #{tpu_custom_call.1} parent=1 // pred_check
      _
    $region7: #{tpu_custom_call.1} parent=1 // pred_check_branch
      %15 = sbr.rel (0) target = $region9
    $region8: #{tpu_custom_call.1} parent=1 // pred_region
      %17 = vsyncadd [#allocation3], 0
      %s19 = sshll.u32 %s1, 4
      %s20 = int_to_ptr.hbm [resolvable:$true] %s19
      %s21 = sshll.u32 [#allocation2], 4
      %s22 = int_to_ptr.vmem [resolvable:$true] %s21
      %24 = dma.hbm_to_vmem [thread:$0]  %s20, 128, %s22, [#allocation3]
    $region9: #{tpu_custom_call.1} parent=1 // pred_fallthru
      _
    // Predicated region
    $region10: #{tpu_custom_call.1} parent=1 // pred_check
      _
    $region11: #{tpu_custom_call.1} parent=1 // pred_check_branch
      %26 = sbr.rel (0) target = $region13
    $region12: #{tpu_custom_call.1} parent=1 // pred_region
      %28 = vsyncadd [#allocation6], 0
      %s30 = sshll.u32 %s2, 4
      %s31 = int_to_ptr.hbm [resolvable:$true] %s30
      %s32 = sshll.u32 [#allocation5], 4
      %s33 = int_to_ptr.vmem [resolvable:$true] %s32
      %35 = dma.hbm_to_vmem [thread:$0]  %s31, 128, %s33, [#allocation6]
    $region13: #{tpu_custom_call.1} parent=1 // pred_fallthru
      _
    // Predicated region
    $region14: #{tpu_custom_call.1} parent=1 // pred_check
      _
    $region15: #{tpu_custom_call.1} parent=1 // pred_check_branch
      %37 = sbr.rel (0) target = $region17
    $region16: #{tpu_custom_call.1} parent=1 // pred_region
      _
    $region17: #{tpu_custom_call.1} parent=1 // pred_fallthru
      _
    // Predicated region
    $region18: #{tpu_custom_call.1} parent=1 // pred_check
      _
    $region19: #{tpu_custom_call.1} parent=1 // pred_check_branch
      %39 = sbr.rel (0) target = $region21
    $region20: #{tpu_custom_call.1} parent=1 // pred_region
      %41 = dma.done [#allocation3], 128
    $region21: #{tpu_custom_call.1} parent=1 // pred_fallthru
      _
    // Predicated region
    $region22: #{tpu_custom_call.1} parent=1 // pred_check
      _
    $region23: #{tpu_custom_call.1} parent=1 // pred_check_branch
      %43 = sbr.rel (0) target = $region25
    $region24: #{tpu_custom_call.1} parent=1 // pred_region
      %45 = dma.done [#allocation6], 128
    $region25: #{tpu_custom_call.1} parent=1 // pred_fallthru
      _
    %v46 = vld [vmem:[%s0] sm:$0xff]
    %v47 = vld [vmem:[#allocation2] sm:$0xff]
    %v48 = vsub.f32 %v46, %v47
    %v49 = vmul.f32 %v48, %v48
    %vm50 = vcmask 261120
    %v51 = vsel %vm50, %v49, 0.0
    %52 = vadd.xlane.f32.xlu0 %v51
    %v53 = vpop.xlane.xlu0 %52
    %v54 = vrot.slane %v53, 4
    %v55 = vadd.f32 %v53, %v54
    %v56 = vrot.slane %v55, 2
    %v57 = vadd.f32 %v55, %v56
    %v58 = vrot.slane %v57, 1
    %v59 = vadd.f32 %v57, %v58
    %s60 = vtos %v59
    %v61 = vld [vmem:[#allocation5] sm:$0xff]
    %vm62 = vcmask 130048
    %v63 = vsel %vm62, %v61, -inf
    %64 = vmax.xlane.f32.xlu0 %v63
    %v65 = vpop.xlane.xlu0 %64
    %v66 = vsub.f32 %v61, %v65
    %v67 = vmul.f32 %v66, 1.442695
    %v68 = vpow.pop %v67
    %v69 = vsel %vm62, %v68, 0.0
    %70 = vadd.xlane.f32.xlu0 %v69
    %v71 = vpop.xlane.xlu0 %70
    %v72 = vlog2.pop %v71
    %v73 = vmul.f32 %v72, 0.6931472
    %v74 = vadd.f32 %v65, %v73
    %v75 = vlaneseq
    %v76 = vand.u32 %v75, 127
    %v77 = vld [vmem:[%s3] sm:$0xff]
    %78 = vset.pattern.permute.xlu0 0
    %79 = vperm.xlu0 %78, %v77
    %v80 = vpop.permute.xlu0 %79
    %vm81 = vcmp.eq.s32.totalorder %v76, %v80
    %v82 = vsel %vm81, %v61, 0.0
    %v83 = vsel %vm62, %v82, 0.0
    %84 = vadd.xlane.f32.xlu0 %v83
    %v85 = vpop.xlane.xlu0 %84
    %v86 = vsub.f32 %v74, %v85
    %vm87 = vcmask 7168
    %v88 = vsel %vm87, %v86, 0.0
    %89 = vadd.xlane.f32.xlu0 %v88
    %v90 = vpop.xlane.xlu0 %89
    %v91 = vrot.slane %v90, 4
    %v92 = vadd.f32 %v90, %v91
    %v93 = vrot.slane %v92, 2
    %v94 = vadd.f32 %v92, %v93
    %v95 = vrot.slane %v94, 1
    %v96 = vadd.f32 %v94, %v95
    %s97 = vtos %v96
    %s98 = smul.f32 %s60, 0.00390625
    %s99 = smul.f32 %s97, 0.125
    %s100 = sadd.f32 %s98, %s99
    %s101 = scalar_lea.smem [#allocation7], 0
    %102 = sst [smem:[%s101]] %s100
    // Predicated region
    $region26: #{tpu_custom_call.1} parent=1 // pred_check
      _
    $region27: #{tpu_custom_call.1} parent=1 // pred_check_branch
      %104 = sbr.rel (0) target = $region29
    $region28: #{tpu_custom_call.1} parent=1 // pred_region
      %106 = vsyncadd [#allocation4], 0
      %s108 = sshll.u32 %s4, 4
      %s109 = int_to_ptr.hbm [resolvable:$true] %s108
      %111 = dma.smem_to_hbm [#allocation7], 16, %s109, [#allocation4]
    $region29: #{tpu_custom_call.1} parent=1 // pred_fallthru
      _
    // Predicated region
    $region30: #{tpu_custom_call.1} parent=1 // pred_check
      _
    $region31: #{tpu_custom_call.1} parent=1 // pred_check_branch
      %113 = sbr.rel (0) target = $region33
    $region32: #{tpu_custom_call.1} parent=1 // pred_region
      %115 = dma.done [#allocation4], 16
    $region33: #{tpu_custom_call.1} parent=1 // pred_fallthru
      _
    %116 = sfence
    %117 = vsyncpa [#allocation3], 1
    %118 = vsyncpa [#allocation6], 1
    %119 = vsyncpa [#allocation4], 1

</llo_original>
